<compile_context>
chip_gen: v5e
topology: v5e:2x2
jax: 0.10.0
libtpu: 0.0.40
codegen_flags: <defaults>
</compile_context>

<pallas_src>
import jax
import jax.numpy as jnp
from jax.experimental import pallas as pl
from jax.experimental.pallas import tpu as pltpu

_LANE = 128
_ROW_ALIGN = 16                    # bf16 sublane packing -> keep batch tiles % 16
_NEG = jnp.float32(-1e30)          # logit fill for padded action columns


def _round_up(x, m):
    return ((x + m - 1) // m) * m


def _cdiv(a, b):
    return -(-a // b)


def _choose_tiling(batch, tile_batch):
    """Even batch split: bounds per-tile padding to < _ROW_ALIGN rows and
    guarantees >=2 grid steps for batches worth splitting (v7x: 2 TCs)."""
    n_tiles = max(1, _cdiv(batch, tile_batch))
    if n_tiles < 2 and batch >= 2 * _ROW_ALIGN:
        n_tiles = 2                      # shard "parallel" axis on v7x's 2 TCs
    tb = _round_up(_cdiv(batch, n_tiles), _ROW_ALIGN)
    return tb, n_tiles * tb, n_tiles


def _mlp_softmax_kernel(x_ref, w1_ref, b1_ref, w2_ref, b2_ref, o_ref):
    # x:  [TB, S]      f32 (unpadded feature dim; cast to bf16 here)
    # w1: [S, H_pad]   bf16, b1: [1, H_pad] f32
    # w2: [H_pad, A_pad] bf16, b2: [1, A_pad] f32 (padded cols = -1e30)
    x = x_ref[...].astype(jnp.bfloat16)
    h = jnp.dot(x, w1_ref[...], preferred_element_type=jnp.float32)
    h = jnp.maximum(h + b1_ref[...], 0.0)                 # bias + ReLU (VPU, f32)

    logits = jnp.dot(h.astype(w2_ref.dtype), w2_ref[...],
                     preferred_element_type=jnp.float32) + b2_ref[...]

    # Numerically stable softmax over the lane-dense (128-padded) action axis.
    # Padded columns hold -1e30 logits -> exp underflows to exactly 0.
    m = jnp.max(logits, axis=-1, keepdims=True)
    e = jnp.exp(logits - m)
    denom = jnp.sum(e, axis=-1, keepdims=True)
    inv = pl.reciprocal(denom, approx=True)                # EUP vrcp slot
    o_ref[...] = (e * inv).astype(o_ref.dtype)


def backward_policy_forward(state, padded_params, action_dim, *,
                            tile_batch=4096, out_dtype=jnp.float32):
    """state: [B, state_dim] f32 -> probs: [B, action_dim] (out_dtype).

    padded_params come from `pad_params` (hidden/action dims 128-aligned, bf16
    weights, K/state dim left unpadded). If the consumer tolerates it, pass
    out_dtype=jnp.bfloat16 to halve the output writeback.
    """
    w1, b1, w2, b2 = padded_params
    batch, state_dim = state.shape
    s_in, h_pad = w1.shape
    a_pad = w2.shape[1]
    assert s_in == state_dim, "w1 input dim must match state_dim (unpadded K)"

    tb, b_pad, n_tiles = _choose_tiling(batch, tile_batch)

    # Only the batch dim is padded (tiny: state_dim-wide f32 rows of zeros).
    x = state
    if b_pad != batch:
        x = jnp.zeros((b_pad, state_dim), state.dtype).at[:batch].set(state)

    out = pl.pallas_call(
        _mlp_softmax_kernel,
        out_shape=jax.ShapeDtypeStruct((b_pad, a_pad), out_dtype),
        grid_spec=pl.GridSpec(
            grid=(n_tiles,),
            in_specs=[
                # State tile: unpadded last dim (== full array dim, so legal).
                pl.BlockSpec((tb, state_dim), lambda i: (i, 0)),
                # Weights/biases: constant index_maps -> resident across steps.
                pl.BlockSpec((state_dim, h_pad), lambda i: (0, 0)),
                pl.BlockSpec((1, h_pad), lambda i: (0, 0)),
                pl.BlockSpec((h_pad, a_pad), lambda i: (0, 0)),
                pl.BlockSpec((1, a_pad), lambda i: (0, 0)),
            ],
            out_specs=pl.BlockSpec((tb, a_pad), lambda i: (i, 0)),
        ),
        compiler_params=pltpu.CompilerParams(
            dimension_semantics=("parallel",),       # batch tiles -> v7x 2 TCs
            vmem_limit_bytes=32 * 1024 * 1024,       # headroom for v5e default
        ),
    )(x, w1, b1, w2, b2)

    # TODO(synk): downstream consumers that can read the padded [B, a_pad] slab
    # directly should do so and skip this extra HBM slice pass.
    return out[:batch, :action_dim]


def init_params(key, state_dim, action_dim, hidden_dim=64):
    """Deterministic init mirroring torch.nn.Linear defaults
    (uniform in +/-1/sqrt(fan_in)); weights stored as [in, out]."""
    k1, k2, k3, k4 = jax.random.split(key, 4)
    lim1 = 1.0 / jnp.sqrt(jnp.float32(state_dim))
    lim2 = 1.0 / jnp.sqrt(jnp.float32(hidden_dim))
    w1 = jax.random.uniform(k1, (state_dim, hidden_dim), jnp.float32, -lim1, lim1)
    b1 = jax.random.uniform(k2, (hidden_dim,), jnp.float32, -lim1, lim1)
    w2 = jax.random.uniform(k3, (hidden_dim, action_dim), jnp.float32, -lim2, lim2)
    b2 = jax.random.uniform(k4, (action_dim,), jnp.float32, -lim2, lim2)
    return w1, b1, w2, b2


def pad_params(w1, b1, w2, b2):
    """One-time padding of the OUTPUT dims (hidden, action) to 128 lanes.

    The contraction (state) dim of w1 is left unpadded — the kernel reads the
    raw [B, state_dim] state. Weights -> bf16 (MXU operands); biases stay f32.
    Padded action columns of b2 get -1e30 so softmax gives them exactly 0."""
    s, h = w1.shape
    a = w2.shape[1]
    h_p, a_p = _round_up(h, _LANE), _round_up(a, _LANE)
    w1_p = jnp.zeros((s, h_p), jnp.float32).at[:, :h].set(w1).astype(jnp.bfloat16)
    b1_p = jnp.zeros((1, h_p), jnp.float32).at[0, :h].set(b1)
    w2_p = jnp.zeros((h_p, a_p), jnp.float32).at[:h, :a].set(w2).astype(jnp.bfloat16)
    b2_p = jnp.full((1, a_p), _NEG, jnp.float32).at[0, :a].set(b2)
    return w1_p, b1_p, w2_p, b2_p


def _reference_padded(state, w1_p, b1_p, w2_p, b2_p):
    """Mirror of the kernel math (same bf16 casts, padded params, exact 1/x)."""
    x = state.astype(jnp.bfloat16)
    h = jnp.dot(x, w1_p, preferred_element_type=jnp.float32) + b1_p
    h = jnp.maximum(h, 0.0)
    logits = jnp.dot(h.astype(jnp.bfloat16), w2_p,
                     preferred_element_type=jnp.float32) + b2_p
    return jax.nn.softmax(logits, axis=-1)


def _reference_f32(state, w1, b1, w2, b2):
    """Module semantics in full f32 (PyTorch-equivalent math)."""
    h = jnp.maximum(state @ w1 + b1, 0.0)
    return jax.nn.softmax(h @ w2 + b2, axis=-1)


if __name__ == "__main__":
    STATE_DIM, ACTION_DIM, HIDDEN_DIM, BATCH = 16, 8, 64, 8

    key = jax.random.PRNGKey(0)
    kx, kp = jax.random.split(key)
    state = jax.random.normal(kx, (BATCH, STATE_DIM), jnp.float32)
    raw_params = init_params(kp, STATE_DIM, ACTION_DIM, HIDDEN_DIM)
    padded_params = pad_params(*raw_params)

    probs = backward_policy_forward(state, padded_params, ACTION_DIM)
    probs = jax.block_until_ready(probs)

    assert probs.shape == (BATCH, ACTION_DIM)
    assert bool(jnp.all(jnp.isfinite(probs)))

    # Check vs. a reference using identical bf16/f32 math (tolerance covers the
    # EUP approximate reciprocal, ~1e-4 relative).
    ref_exact = _reference_padded(state, *padded_params)[:, :ACTION_DIM]
    assert jnp.allclose(probs, ref_exact, atol=2e-3, rtol=2e-3)

    # Semantic check vs. full-f32 module math (slack for bf16 MXU operands).
    ref_f32 = _reference_f32(state, *raw_params)
    assert jnp.allclose(probs, ref_f32, atol=3e-2, rtol=3e-2)

    # Probabilities sum to ~1 (padded action columns contribute exactly 0;
    # slack for the approximate reciprocal).
    assert jnp.allclose(jnp.sum(probs, axis=-1), 1.0, atol=2e-3)

    print("KERNEL_OK")
</pallas_src>

<mosaic_0001>
module attributes {stable_mosaic.version = 11 : i64} {
  func.func @_mlp_softmax_kernel(%arg0: i32, %arg1: memref<16x16xf32, #tpu.memory_space<vmem>>, %arg2: memref<16x128xbf16, #tpu.memory_space<vmem>>, %arg3: memref<1x128xf32, #tpu.memory_space<vmem>>, %arg4: memref<128x128xbf16, #tpu.memory_space<vmem>>, %arg5: memref<1x128xf32, #tpu.memory_space<vmem>>, %arg6: memref<16x128xf32, #tpu.memory_space<vmem>>) attributes {dimension_semantics = [#tpu.dimension_semantics<parallel>], iteration_bounds = array<i64: 1>, scalar_prefetch = 0 : i64, scratch_operands = 0 : i64, tpu.core_type = #tpu.core_type<tc>, window_params = [{transform_indices = @transform_0, window_bounds = array<i64: 16, 16>}, {pipeline_mode = #tpu.pipeline_mode<synchronous>, transform_indices = @transform_1, window_bounds = array<i64: 16, 128>}, {pipeline_mode = #tpu.pipeline_mode<synchronous>, transform_indices = @transform_2, window_bounds = array<i64: 1, 128>}, {pipeline_mode = #tpu.pipeline_mode<synchronous>, transform_indices = @transform_3, window_bounds = array<i64: 128, 128>}, {pipeline_mode = #tpu.pipeline_mode<synchronous>, transform_indices = @transform_4, window_bounds = array<i64: 1, 128>}, {transform_indices = @transform_5, window_bounds = array<i64: 16, 128>}]} {
    %c0 = arith.constant 0 : index
    %c0_0 = arith.constant 0 : index
    %0 = vector.load %arg1[%c0, %c0_0] : memref<16x16xf32, #tpu.memory_space<vmem>>, vector<16x16xf32>
    %1 = arith.truncf %0 : vector<16x16xf32> to vector<16x16xbf16>
    %c0_1 = arith.constant 0 : index
    %c0_2 = arith.constant 0 : index
    %2 = vector.load %arg2[%c0_1, %c0_2] : memref<16x128xbf16, #tpu.memory_space<vmem>>, vector<16x128xbf16>
    %cst = arith.constant dense<0.000000e+00> : vector<16x128xf32>
    %3 = tpu.matmul %1, %2, %cst {dimension_numbers = #tpu.dot_dimension_numbers<[1], [0], [0], [1], [0, 0, 1, 1], [], []>} : vector<16x16xbf16>, vector<16x128xbf16>, vector<16x128xf32> -> vector<16x128xf32>
    %c0_3 = arith.constant 0 : index
    %c0_4 = arith.constant 0 : index
    %4 = vector.load %arg3[%c0_3, %c0_4] : memref<1x128xf32, #tpu.memory_space<vmem>>, vector<1x128xf32>
    %5 = vector.broadcast %4 : vector<1x128xf32> to vector<16x128xf32>
    %6 = arith.addf %3, %5 : vector<16x128xf32>
    %cst_5 = arith.constant 0.000000e+00 : f32
    %7 = vector.broadcast %cst_5 : f32 to vector<16x128xf32>
    %8 = arith.maximumf %6, %7 : vector<16x128xf32>
    %9 = arith.truncf %8 : vector<16x128xf32> to vector<16x128xbf16>
    %c0_6 = arith.constant 0 : index
    %c0_7 = arith.constant 0 : index
    %10 = vector.load %arg4[%c0_6, %c0_7] : memref<128x128xbf16, #tpu.memory_space<vmem>>, vector<128x128xbf16>
    %cst_8 = arith.constant dense<0.000000e+00> : vector<16x128xf32>
    %11 = tpu.matmul %9, %10, %cst_8 {dimension_numbers = #tpu.dot_dimension_numbers<[1], [0], [0], [1], [0, 0, 1, 1], [], []>} : vector<16x128xbf16>, vector<128x128xbf16>, vector<16x128xf32> -> vector<16x128xf32>
    %c0_9 = arith.constant 0 : index
    %c0_10 = arith.constant 0 : index
    %12 = vector.load %arg5[%c0_9, %c0_10] : memref<1x128xf32, #tpu.memory_space<vmem>>, vector<1x128xf32>
    %13 = vector.broadcast %12 : vector<1x128xf32> to vector<16x128xf32>
    %14 = arith.addf %11, %13 : vector<16x128xf32>
    %cst_11 = arith.constant dense<0xFF800000> : vector<16xf32>
    %15 = vector.multi_reduction <maximumf>, %14, %cst_11 [1] : vector<16x128xf32> to vector<16xf32>
    %16 = vector.shape_cast %15 : vector<16xf32> to vector<16x1xf32>
    %17 = vector.broadcast %16 : vector<16x1xf32> to vector<16x128xf32>
    %18 = arith.subf %14, %17 : vector<16x128xf32>
    %19 = math.exp %18 : vector<16x128xf32>
    %cst_12 = arith.constant dense<0.000000e+00> : vector<16xf32>
    %20 = vector.multi_reduction <add>, %19, %cst_12 [1] : vector<16x128xf32> to vector<16xf32>
    %21 = vector.shape_cast %20 : vector<16xf32> to vector<16x1xf32>
    %22 = tpu.reciprocal %21 {approx = true} : vector<16x1xf32> -> vector<16x1xf32>
    %23 = vector.broadcast %22 : vector<16x1xf32> to vector<16x128xf32>
    %24 = arith.mulf %19, %23 : vector<16x128xf32>
    %c0_13 = arith.constant 0 : index
    %c0_14 = arith.constant 0 : index
    %25 = vector.load %arg6[%c0_13, %c0_14] : memref<16x128xf32, #tpu.memory_space<vmem>>, vector<16x128xf32>
    tpu.vector_store %arg6[%c0_13, %c0_14], %24 {strides = array<i32>} : memref<16x128xf32, #tpu.memory_space<vmem>>, vector<16x128xf32>,
    return
  }
  func.func @transform_0(%arg0: i32) -> (i32, i32) {
    %c0_i32 = arith.constant 0 : i32
    %c0_i32_0 = arith.constant 0 : i32
    return %arg0, %c0_i32 : i32, i32
  }
  func.func @transform_1(%arg0: i32) -> (i32, i32) {
    %c0_i32 = arith.constant 0 : i32
    %c0_i32_0 = arith.constant 0 : i32
    %c0_i32_1 = arith.constant 0 : i32
    return %c0_i32, %c0_i32_0 : i32, i32
  }
  func.func @transform_2(%arg0: i32) -> (i32, i32) {
    %c0_i32 = arith.constant 0 : i32
    %c0_i32_0 = arith.constant 0 : i32
    %c0_i32_1 = arith.constant 0 : i32
    return %c0_i32, %c0_i32_0 : i32, i32
  }
  func.func @transform_3(%arg0: i32) -> (i32, i32) {
    %c0_i32 = arith.constant 0 : i32
    %c0_i32_0 = arith.constant 0 : i32
    %c0_i32_1 = arith.constant 0 : i32
    return %c0_i32, %c0_i32_0 : i32, i32
  }
  func.func @transform_4(%arg0: i32) -> (i32, i32) {
    %c0_i32 = arith.constant 0 : i32
    %c0_i32_0 = arith.constant 0 : i32
    %c0_i32_1 = arith.constant 0 : i32
    return %c0_i32, %c0_i32_0 : i32, i32
  }
  func.func @transform_5(%arg0: i32) -> (i32, i32) {
    %c0_i32 = arith.constant 0 : i32
    %c0_i32_0 = arith.constant 0 : i32
    return %arg0, %c0_i32 : i32, i32
  }
}

</mosaic_0001>

<llo_original>
// kernel: tpu_custom_call.1
$region0: #{tpu_custom_call.1}
  #allocation0 [shape = 'u32[]', space=smem, size = 0x4, offset = 0x4, fixed_abs, tag = 'smem constant byte address 0x4 - core index']
  #allocation1 [shape = 'u32[72,128]{1,0:T(1,128)}', space=vmem, size = 0x9000, scoped, tag = 'internal scratch']
  %s0 = inlined_call_operand.hbm [shape: f32[16,16], index: 0, kind: input, shape index: {}]
  %s1 = inlined_call_operand.hbm [shape: bf16[16,128], index: 1, kind: input, shape index: {}]
  %s2 = inlined_call_operand.vmem [shape: f32[1,128], index: 2, kind: input, shape index: {}]
  %s3 = inlined_call_operand.hbm [shape: bf16[128,128], index: 3, kind: input, shape index: {}]
  %s4 = inlined_call_operand.vmem [shape: f32[1,128], index: 4, kind: input, shape index: {}]
  %s5 = inlined_call_operand.hbm [shape: f32[16,128], index: 5, kind: output, shape index: {}]
  %s6 = sld [smem:[#allocation0]]
  $region42: #{tpu_custom_call.1} parent=0
    _
  %s8 = ssub.s32 1, %s6
  %s9 = scalar_select 0, %s8, %s6
  $region1: #{tpu_custom_call.1} parent=0
    #allocation2 [shape = 'u8[8192]{0}', space=vmem, size = 0x2000, scoped, tag = 'input window, operand 0, single buffered']
    #allocation3 [shape = 's32[1]{0}', space=sflag, size = 0x4, scoped, tag = 'scoped memory for tpu_custom_call.1']
    #allocation4 [shape = 's32[1]{0}', space=sflag, size = 0x4, scoped, tag = 'scoped memory for tpu_custom_call.1']
    #allocation5 [shape = 'u8[4096]{0}', space=vmem, size = 0x1000, scoped, tag = 'input window, operand 1, single buffered']
    #allocation6 [shape = 's32[1]{0}', space=sflag, size = 0x4, scoped, tag = 'scoped memory for tpu_custom_call.1']
    #allocation7 [shape = 'u8[32768]{0}', space=vmem, size = 0x8000, scoped, tag = 'input window, operand 3, single buffered']
    #allocation8 [shape = 'u8[8192]{0}', space=vmem, size = 0x2000, scoped, tag = 'output window, operand 0, single buffered']
    %10 = vsyncpa [#allocation3], 0
    %11 = vsyncpa [#allocation6], 0
    %12 = vsyncpa [#allocation4], 0
    // Predicated region
    $region2: #{tpu_custom_call.1} parent=1 // pred_check
      _
    $region3: #{tpu_custom_call.1} parent=1 // pred_check_branch
      %14 = sbr.rel (0) target = $region5
    $region4: #{tpu_custom_call.1} parent=1 // pred_region
      %16 = vsyncadd [#allocation3], 0
      %s17 = sshll.u32 %s0, 4
      %s18 = int_to_ptr.hbm [resolvable:$true] %s17
      %s19 = sshll.u32 [#allocation2], 4
      %s20 = int_to_ptr.vmem [resolvable:$true] %s19
      %25 = dma.hbm_to_vmem [thread:$0]  %s18, 256, %s20, [#allocation3], 128, 128, 8
    $region5: #{tpu_custom_call.1} parent=1 // pred_fallthru
      _
    // Predicated region
    $region6: #{tpu_custom_call.1} parent=1 // pred_check
      _
    $region7: #{tpu_custom_call.1} parent=1 // pred_check_branch
      %27 = sbr.rel (0) target = $region9
    $region8: #{tpu_custom_call.1} parent=1 // pred_region
      %29 = vsyncadd [#allocation6], 0
      %s30 = sshll.u32 %s1, 4
      %s31 = int_to_ptr.hbm [resolvable:$true] %s30
      %s32 = sshll.u32 [#allocation5], 4
      %s33 = int_to_ptr.vmem [resolvable:$true] %s32
      %38 = dma.hbm_to_vmem [thread:$0]  %s31, 128, %s33, [#allocation6], 64, 64, 4
    $region9: #{tpu_custom_call.1} parent=1 // pred_fallthru
      _
    // Predicated region
    $region10: #{tpu_custom_call.1} parent=1 // pred_check
      _
    $region11: #{tpu_custom_call.1} parent=1 // pred_check_branch
      %40 = sbr.rel (0) target = $region13
    $region12: #{tpu_custom_call.1} parent=1 // pred_region
      _
    $region13: #{tpu_custom_call.1} parent=1 // pred_fallthru
      _
    // Predicated region
    $region14: #{tpu_custom_call.1} parent=1 // pred_check
      _
    $region15: #{tpu_custom_call.1} parent=1 // pred_check_branch
      %42 = sbr.rel (0) target = $region17
    $region16: #{tpu_custom_call.1} parent=1 // pred_region
      %44 = vsyncadd [#allocation6], 0
      %s45 = sshll.u32 %s3, 4
      %s46 = int_to_ptr.hbm [resolvable:$true] %s45
      %s47 = sshll.u32 [#allocation7], 4
      %s48 = int_to_ptr.vmem [resolvable:$true] %s47
      %53 = dma.hbm_to_vmem [thread:$0]  %s46, 1024, %s48, [#allocation6], 64, 64, 4
    $region17: #{tpu_custom_call.1} parent=1 // pred_fallthru
      _
    // Predicated region
    $region18: #{tpu_custom_call.1} parent=1 // pred_check
      _
    $region19: #{tpu_custom_call.1} parent=1 // pred_check_branch
      %55 = sbr.rel (0) target = $region21
    $region20: #{tpu_custom_call.1} parent=1 // pred_region
      _
    $region21: #{tpu_custom_call.1} parent=1 // pred_fallthru
      _
    // Predicated region
    $region22: #{tpu_custom_call.1} parent=1 // pred_check
      _
    $region23: #{tpu_custom_call.1} parent=1 // pred_check_branch
      %57 = sbr.rel (0) target = $region25
    $region24: #{tpu_custom_call.1} parent=1 // pred_region
      %59 = dma.done [#allocation3], 256
    $region25: #{tpu_custom_call.1} parent=1 // pred_fallthru
      _
    // Predicated region
    $region26: #{tpu_custom_call.1} parent=1 // pred_check
      _
    $region27: #{tpu_custom_call.1} parent=1 // pred_check_branch
      %61 = sbr.rel (0) target = $region29
    $region28: #{tpu_custom_call.1} parent=1 // pred_region
      %63 = dma.done [#allocation6], 128
    $region29: #{tpu_custom_call.1} parent=1 // pred_fallthru
      _
    // Predicated region
    $region30: #{tpu_custom_call.1} parent=1 // pred_check
      _
    $region31: #{tpu_custom_call.1} parent=1 // pred_check_branch
      %65 = sbr.rel (0) target = $region33
    $region32: #{tpu_custom_call.1} parent=1 // pred_region
      %67 = dma.done [#allocation6], 1024
    $region33: #{tpu_custom_call.1} parent=1 // pred_fallthru
      _
    %v69 = vld [vmem:[#allocation2] sm:$0xff]
    %v70 = vld [vmem:[#allocation2 + $0x8] sm:$0xff]
    %v71 = vpack.c.bf16 %v70, %v69
    %v72 = vld [vmem:[#allocation5] sm:$0xf]
    %v73 = vld [vmem:[#allocation5 + $0x4] sm:$0xf]
    %v74 = vld [vmem:[%s2] sm:$0x1]
    %v76 = vperm.slane %v74, 0
    %v80 = vunpack.c.l.b16 %v72
    %v81 = vunpack.c.l.b16 %v73
    %v82 = vpack.c.b16 %v81, %v80
    %vm84 = vcmask 130048
    %v86 = vsel %vm84, %v71, 0
    %88 = vmatpush.bf16.msra.mxu0 0
    %89 = vmatpush.bf16.msra.mxu0 0
    %90 = vmatpush.bf16.msra.mxu0 0
    %91 = vmatpush.bf16.msra.mxu0 0
    %92 = vmatpush.bf16.msra.mxu0 0
    %93 = vmatpush.bf16.msra.mxu0 0
    %94 = vmatpush.bf16.msra.mxu0 0
    %95 = vmatpush.bf16.msra.mxu0 %v82
    %96 = vmatmul.bf16.gmra.mxu0 %v86
    %v97 = vpop.f32.mrf.mxu0
    %v98 = vadd.f32 %v76, %v97
    %v99 = vpop.f32.mrf.mxu0
    %v100 = vadd.f32 %v76, %v99
    %101 = vdwg.mxu0
    %v102 = vmax.f32 %v98, 0.0
    %v103 = vmax.f32 %v100, 0.0
    %v104 = vpack.c.bf16 %v103, %v102
    %v105 = vld [vmem:[#allocation7] sm:$0xf]
    %v106 = vld [vmem:[#allocation7 + $0x4] sm:$0xf]
    %v107 = vld [vmem:[#allocation7 + $0x8] sm:$0xf]
    %v108 = vld [vmem:[#allocation7 + $0xc] sm:$0xf]
    %v109 = vld [vmem:[#allocation7 + $0x10] sm:$0xf]
    %v110 = vld [vmem:[#allocation7 + $0x14] sm:$0xf]
    %v111 = vld [vmem:[#allocation7 + $0x18] sm:$0xf]
    %v112 = vld [vmem:[#allocation7 + $0x1c] sm:$0xf]
    %v113 = vld [vmem:[#allocation7 + $0x20] sm:$0xf]
    %v114 = vld [vmem:[#allocation7 + $0x24] sm:$0xf]
    %v115 = vld [vmem:[#allocation7 + $0x28] sm:$0xf]
    %v116 = vld [vmem:[#allocation7 + $0x2c] sm:$0xf]
    %v117 = vld [vmem:[#allocation7 + $0x30] sm:$0xf]
    %v118 = vld [vmem:[#allocation7 + $0x34] sm:$0xf]
    %v119 = vld [vmem:[#allocation7 + $0x38] sm:$0xf]
    %v120 = vld [vmem:[#allocation7 + $0x3c] sm:$0xf]
    %v121 = vld [vmem:[%s4] sm:$0x1]
    %v123 = vperm.slane %v121, 0
    %v141 = vunpack.c.l.b16 %v105
    %v142 = vunpack.c.l.b16 %v106
    %v143 = vunpack.c.l.b16 %v107
    %v144 = vunpack.c.l.b16 %v108
    %v145 = vunpack.c.l.b16 %v109
    %v146 = vunpack.c.l.b16 %v110
    %v147 = vunpack.c.l.b16 %v111
    %v148 = vunpack.c.l.b16 %v112
    %v149 = vunpack.c.l.b16 %v113
    %v150 = vunpack.c.l.b16 %v114
    %v151 = vunpack.c.l.b16 %v115
    %v152 = vunpack.c.l.b16 %v116
    %v153 = vunpack.c.l.b16 %v117
    %v154 = vunpack.c.l.b16 %v118
    %v155 = vunpack.c.l.b16 %v119
    %v156 = vunpack.c.l.b16 %v120
    %v157 = vpack.c.b16 %v142, %v141
    %v158 = vpack.c.b16 %v144, %v143
    %v159 = vpack.c.b16 %v146, %v145
    %v160 = vpack.c.b16 %v148, %v147
    %v161 = vpack.c.b16 %v150, %v149
    %v162 = vpack.c.b16 %v152, %v151
    %v163 = vpack.c.b16 %v154, %v153
    %v164 = vpack.c.b16 %v156, %v155
    %173 = vmatpush.bf16.msra.mxu0 %v164
    %174 = vmatpush.bf16.msra.mxu0 %v163
    %175 = vmatpush.bf16.msra.mxu0 %v162
    %176 = vmatpush.bf16.msra.mxu0 %v161
    %177 = vmatpush.bf16.msra.mxu0 %v160
    %178 = vmatpush.bf16.msra.mxu0 %v159
    %179 = vmatpush.bf16.msra.mxu0 %v158
    %180 = vmatpush.bf16.msra.mxu0 %v157
    %181 = vmatmul.bf16.gmra.mxu0 %v104
    %v182 = vpop.f32.mrf.mxu0
    %v183 = vadd.f32 %v123, %v182
    %v184 = vpop.f32.mrf.mxu0
    %v185 = vadd.f32 %v123, %v184
    %186 = vdwg.mxu0
    %187 = vmax.xlane.f32.xlu0 %v183
    %v188 = vpop.xlane.xlu0 %187
    %189 = vmax.xlane.f32.xlu0 %v185
    %v190 = vpop.xlane.xlu0 %189
    %v191 = vsub.f32 %v183, %v188
    %v192 = vsub.f32 %v185, %v190
    %v193 = vmul.f32 %v191, 1.442695
    %v194 = vpow.pop %v193
    %v195 = vmul.f32 %v192, 1.442695
    %v196 = vpow.pop %v195
    %197 = vadd.xlane.f32.xlu0 %v194
    %v198 = vpop.xlane.xlu0 %197
    %199 = vadd.xlane.f32.xlu0 %v196
    %v200 = vpop.xlane.xlu0 %199
    %v201 = vrcp.pop %v198
    %v202 = vrcp.pop %v200
    %v203 = vmul.f32 %v194, %v201
    %v204 = vmul.f32 %v196, %v202
    %205 = vst [vmem:[#allocation8] sm:$0xff] %v203
    %206 = vst [vmem:[#allocation8 + $0x8] sm:$0xff] %v204
    // Predicated region
    $region34: #{tpu_custom_call.1} parent=1 // pred_check
      _
    $region35: #{tpu_custom_call.1} parent=1 // pred_check_branch
      %208 = sbr.rel (0) target = $region37
    $region36: #{tpu_custom_call.1} parent=1 // pred_region
      %210 = vsyncadd [#allocation4], 0
      %s211 = sshll.u32 [#allocation8], 4
      %s212 = int_to_ptr.vmem [resolvable:$true] %s211
      %s213 = sshll.u32 %s5, 4
      %s214 = int_to_ptr.hbm [resolvable:$true] %s213
      %219 = dma.vmem_to_hbm [thread:$0]  %s212, 256, %s214, [#allocation4], 128, 128, 8
    $region37: #{tpu_custom_call.1} parent=1 // pred_fallthru
      _
    // Predicated region
    $region38: #{tpu_custom_call.1} parent=1 // pred_check
      _
    $region39: #{tpu_custom_call.1} parent=1 // pred_check_branch
      %221 = sbr.rel (0) target = $region41
    $region40: #{tpu_custom_call.1} parent=1 // pred_region
      %223 = dma.done [#allocation4], 256
    $region41: #{tpu_custom_call.1} parent=1 // pred_fallthru
      _
    %224 = vsyncpa [#allocation3], 1
    %225 = vsyncpa [#allocation6], 1
    %226 = vsyncpa [#allocation4], 1

</llo_original>
